<compile_context>
chip_gen: v5e
topology: v5e:2x2
jax: 0.10.0
libtpu: 0.0.40
codegen_flags: <defaults>
</compile_context>

<pallas_src>
import functools

import jax
import jax.numpy as jnp
from jax.experimental import pallas as pl
from jax.experimental.pallas import tpu as pltpu

HIDDEN = 32          # hidden width of each sub-model
IN_ROWS = 8          # xyz(3) | t(1) | dirs(3) | 1 (bias fold)
OUT_ROWS = 12        # rgb(3) | sigma(1) | rgb_s(3) | rgb_d(3) | sigma_s(1) | sigma_d(1)


def _round_up(n, m):
    return ((n + m - 1) // m) * m


# ----------------------------------------------------------------------------
# Kernel: one fused block-diagonal MLP (static + dynamic), feature-major.
# Shapes inside the kernel (blk = row tile):
#   xin  [8, blk]   w1 [2H, 8]   w2 [2H, 2H]   b2 [2H, 1]   wh [8, 2H]   bh [8, 1]
#   out  [12, blk]
# ----------------------------------------------------------------------------
def hybrid_kernel(xin_ref, w1_ref, w2_ref, b2_ref, wh_ref, bh_ref, out_ref):
    xin = xin_ref[...].astype(jnp.bfloat16)                       # [8, blk]

    # Layer 1 (bias folded into the weight via the constant-1 input row).
    h = jnp.dot(w1_ref[...], xin, preferred_element_type=jnp.float32)   # [2H, blk]
    h = jnp.maximum(h, 0.0)

    # Layer 2: block-diagonal [2H, 2H].
    h = jnp.dot(w2_ref[...], h.astype(jnp.bfloat16),
                preferred_element_type=jnp.float32) + b2_ref[...]
    h = jnp.maximum(h, 0.0)

    # Fused heads: z rows = [sigma_s, rgb_s(3), sigma_d, rgb_d(3)].
    z = jnp.dot(wh_ref[...], h.astype(jnp.bfloat16),
                preferred_element_type=jnp.float32) + bh_ref[...]        # [8, blk]

    # Single-pass activation epilogue over the whole [8, blk] slab.
    e = jnp.exp(-jnp.abs(z))                                     # one EUP pass
    softp = jnp.maximum(z, 0.0) + jnp.log(1.0 + e)               # stable softplus
    sigm = jnp.where(z >= 0.0, 1.0, e) * pl.reciprocal(1.0 + e, approx=True)
    row = jax.lax.broadcasted_iota(jnp.int32, z.shape, 0)
    is_sigma_row = (row == 0) | (row == 4)
    act = jnp.where(is_sigma_row, softp, sigm)

    sig_s, rgb_s = act[0:1], act[1:4]
    sig_d, rgb_d = act[4:5], act[5:8]

    # HybridRadianceField.merge_result with output_sdf = False.
    sigma = sig_s + sig_d
    inv = pl.reciprocal(sigma + 1e-6, approx=True)
    rgb = (rgb_s * sig_s + rgb_d * sig_d) * inv

    # One lane-dense full-block store.
    out_ref[...] = jnp.concatenate([rgb, sigma, rgb_s, rgb_d, sig_s, sig_d], axis=0)


# ----------------------------------------------------------------------------
# Host-side parameter packing: two tiny MLPs -> one block-diagonal,
# feature-major MLP with bf16 matmul weights (biases stay f32).
# ----------------------------------------------------------------------------
def _pack_params(static_params, dynamic_params):
    w1s, b1s, w2s, b2s, wss, bss, wrs, brs = static_params    # in_dim 6 = xyz + dirs
    w1d, b1d, w2d, b2d, wsd, bsd, wrd, brd = dynamic_params   # in_dim 7 = xyzt + dirs
    H = w2s.shape[0]
    f32 = jnp.float32

    # Layer 1: input rows = [xyz(0:3), t(3), dirs(4:7), bias(7)];
    # output cols 0:H static (ignores t), H:2H dynamic.
    w1 = jnp.zeros((IN_ROWS, 2 * H), f32)
    w1 = w1.at[0:3, :H].set(w1s[0:3])
    w1 = w1.at[4:7, :H].set(w1s[3:6])
    w1 = w1.at[7:8, :H].set(b1s)
    w1 = w1.at[0:4, H:].set(w1d[0:4])
    w1 = w1.at[4:7, H:].set(w1d[4:7])
    w1 = w1.at[7:8, H:].set(b1d)

    # Layer 2: block-diagonal [2H, 2H].
    w2 = jnp.zeros((2 * H, 2 * H), f32)
    w2 = w2.at[:H, :H].set(w2s)
    w2 = w2.at[H:, H:].set(w2d)
    b2 = jnp.concatenate([b2s, b2d], axis=-1)                 # [1, 2H]

    # Heads fused: cols (-> rows after transpose) = [sigma_s, rgb_s(3), sigma_d, rgb_d(3)].
    wh = jnp.zeros((2 * H, 8), f32)
    wh = wh.at[:H, 0:1].set(wss)
    wh = wh.at[:H, 1:4].set(wrs)
    wh = wh.at[H:, 4:5].set(wsd)
    wh = wh.at[H:, 5:8].set(wrd)
    bh = jnp.concatenate([bss, brs, bsd, brd], axis=-1)       # [1, 8]

    bf16 = jnp.bfloat16
    return (w1.T.astype(bf16),   # [2H, 8]
            w2.T.astype(bf16),   # [2H, 2H]
            b2.T,                # [2H, 1] f32
            wh.T.astype(bf16),   # [8, 2H]
            bh.T)                # [8, 1]  f32


def init_params(key, in_dim, hidden=HIDDEN):
    ks = jax.random.split(key, 4)
    w1 = jax.random.normal(ks[0], (in_dim, hidden), jnp.float32) * 0.3
    b1 = jnp.zeros((1, hidden), jnp.float32)
    w2 = jax.random.normal(ks[1], (hidden, hidden), jnp.float32) * 0.3
    b2 = jnp.zeros((1, hidden), jnp.float32)
    wsig = jax.random.normal(ks[2], (hidden, 1), jnp.float32) * 0.3
    bsig = jnp.full((1, 1), 0.1, jnp.float32)
    wrgb = jax.random.normal(ks[3], (hidden, 3), jnp.float32) * 0.3
    brgb = jnp.zeros((1, 3), jnp.float32)
    return (w1, b1, w2, b2, wsig, bsig, wrgb, brgb)


# ----------------------------------------------------------------------------
# Wrapper
# ----------------------------------------------------------------------------
@functools.partial(jax.jit, static_argnames=("tm",))
def hybrid_forward(x, dirs, static_params, dynamic_params, tm=4096):
    """x: [N, 4] (xyz + t), dirs: [N, 3]. Returns (rgb, sigma, extra dict)."""
    N = x.shape[0]
    assert x.shape[1] == 4 and dirs.shape[1] == 3
    assert tm % 128 == 0

    # Lane-dense row tile (multiple of 128); pad the ragged tail.
    blk = min(tm, _round_up(N, 128))
    n_pad = _round_up(N, blk)

    # Feature-major packed input: rows = [xyz, t, dirs, 1]; b1 folded into w1.
    xin = jnp.concatenate([x, dirs, jnp.ones((N, 1), x.dtype)], axis=-1).T  # [8, N]
    if n_pad != N:
        xin = jnp.pad(xin, ((0, 0), (0, n_pad - N)))

    packed = _pack_params(static_params, dynamic_params)      # w1, w2, b2, wh, bh

    in_specs = ([pl.BlockSpec((IN_ROWS, blk), lambda i: (0, i))]
                + [pl.BlockSpec(w.shape, lambda i: (0, 0)) for w in packed])
    out_spec = pl.BlockSpec((OUT_ROWS, blk), lambda i: (0, i))

    flops = 2 * n_pad * (IN_ROWS * 2 * HIDDEN + (2 * HIDDEN) ** 2 + 2 * HIDDEN * 8)
    bytes_accessed = (4 * n_pad * (IN_ROWS + OUT_ROWS)
                      + sum(int(w.size) * w.dtype.itemsize for w in packed))
    cost = pl.CostEstimate(flops=flops,
                           transcendentals=24 * n_pad,
                           bytes_accessed=bytes_accessed)

    out = pl.pallas_call(
        hybrid_kernel,
        out_shape=jax.ShapeDtypeStruct((OUT_ROWS, n_pad), jnp.float32),
        grid_spec=pltpu.PrefetchScalarGridSpec(
            num_scalar_prefetch=0,
            grid=(n_pad // blk,),
            in_specs=in_specs,
            out_specs=out_spec,
        ),
        compiler_params=pltpu.CompilerParams(
            dimension_semantics=("parallel",),      # row tiles shard across v7x TCs
            vmem_limit_bytes=32 * 1024 * 1024),
        cost_estimate=cost,
    )(xin, *packed)

    out = out[:, :N]
    rgb, sigma = out[0:3].T, out[3:4].T
    extra = {"rgb_s": out[4:7].T, "rgb_d": out[7:10].T,
             "sigma_s": out[10:11].T, "sigma_d": out[11:12].T}
    # TODO(synk): cond conditioning, update_fading_step / print_fading and the
    # output_sdf=True merge branch are Python-side / unused here and not ported.
    return rgb, sigma, extra


# ----------------------------------------------------------------------------
# Pure-JAX reference (mirrors the PyTorch forward + merge_result, full f32).
# ----------------------------------------------------------------------------
def _ref_forward(x, dirs, sp, dp):
    def mlp(inp, p):
        w1, b1, w2, b2, wsig, bsig, wrgb, brgb = p
        h = jax.nn.relu(inp @ w1 + b1)
        h = jax.nn.relu(h @ w2 + b2)
        return jax.nn.sigmoid(h @ wrgb + brgb), jax.nn.softplus(h @ wsig + bsig)

    rgb_s, sig_s = mlp(jnp.concatenate([x[:, :3], dirs], -1), sp)
    rgb_d, sig_d = mlp(jnp.concatenate([x, dirs], -1), dp)
    sigma = sig_s + sig_d
    rgb = (rgb_s * sig_s + rgb_d * sig_d) / (sigma + 1e-6)
    extra = {"rgb_s": rgb_s, "rgb_d": rgb_d, "sigma_s": sig_s, "sigma_d": sig_d}
    return rgb, sigma, extra


if __name__ == "__main__":
    key = jax.random.PRNGKey(0)
    k_x, k_d, k_s, k_dyn = jax.random.split(key, 4)

    N = 1000   # NOT a multiple of the tile: exercises the padded tail
    x = jax.random.normal(k_x, (N, 4), jnp.float32)            # xyz + t
    dirs = jax.random.normal(k_d, (N, 3), jnp.float32)
    dirs = dirs / jnp.linalg.norm(dirs, axis=-1, keepdims=True)

    static_params = init_params(k_s, in_dim=6)     # xyz + dirs
    dynamic_params = init_params(k_dyn, in_dim=7)  # xyzt + dirs

    # Small tile for the demo -> 2 grid steps (also what v7x needs to use both TCs).
    rgb, sigma, extra = hybrid_forward(x, dirs, static_params, dynamic_params, tm=512)
    jax.block_until_ready((rgb, sigma, extra))

    rgb_ref, sigma_ref, extra_ref = _ref_forward(x, dirs, static_params, dynamic_params)
    assert rgb.shape == (N, 3) and sigma.shape == (N, 1)
    # bf16 matmul operands (f32 accumulation) -> relaxed tolerance vs f32 reference.
    tol = dict(atol=5e-2, rtol=5e-2)
    assert jnp.allclose(rgb, rgb_ref, **tol)
    assert jnp.allclose(sigma, sigma_ref, **tol)
    for k in ("rgb_s", "rgb_d", "sigma_s", "sigma_d"):
        assert extra[k].shape == extra_ref[k].shape
        assert jnp.allclose(extra[k], extra_ref[k], **tol)

    print("KERNEL_OK")
</pallas_src>

<mosaic_0001>
module attributes {stable_mosaic.version = 11 : i64} {
  func.func @hybrid_kernel(%arg0: i32, %arg1: memref<8x512xf32, #tpu.memory_space<vmem>>, %arg2: memref<64x8xbf16, #tpu.memory_space<vmem>>, %arg3: memref<64x64xbf16, #tpu.memory_space<vmem>>, %arg4: memref<64x1xf32, #tpu.memory_space<vmem>>, %arg5: memref<8x64xbf16, #tpu.memory_space<vmem>>, %arg6: memref<8x1xf32, #tpu.memory_space<vmem>>, %arg7: memref<12x512xf32, #tpu.memory_space<vmem>>) attributes {dimension_semantics = [#tpu.dimension_semantics<parallel>], iteration_bounds = array<i64: 2>, scalar_prefetch = 0 : i64, scratch_operands = 0 : i64, tpu.core_type = #tpu.core_type<tc>, window_params = [{transform_indices = @transform_0, window_bounds = array<i64: 8, 512>}, {pipeline_mode = #tpu.pipeline_mode<synchronous>, transform_indices = @transform_1, window_bounds = array<i64: 64, 8>}, {pipeline_mode = #tpu.pipeline_mode<synchronous>, transform_indices = @transform_2, window_bounds = array<i64: 64, 64>}, {pipeline_mode = #tpu.pipeline_mode<synchronous>, transform_indices = @transform_3, window_bounds = array<i64: 64, 1>}, {pipeline_mode = #tpu.pipeline_mode<synchronous>, transform_indices = @transform_4, window_bounds = array<i64: 8, 64>}, {pipeline_mode = #tpu.pipeline_mode<synchronous>, transform_indices = @transform_5, window_bounds = array<i64: 8, 1>}, {transform_indices = @transform_6, window_bounds = array<i64: 12, 512>}]} {
    %c0 = arith.constant 0 : index
    %c0_0 = arith.constant 0 : index
    %0 = vector.load %arg1[%c0, %c0_0] : memref<8x512xf32, #tpu.memory_space<vmem>>, vector<8x512xf32>
    %1 = arith.truncf %0 : vector<8x512xf32> to vector<8x512xbf16>
    %c0_1 = arith.constant 0 : index
    %c0_2 = arith.constant 0 : index
    %2 = vector.load %arg2[%c0_1, %c0_2] : memref<64x8xbf16, #tpu.memory_space<vmem>>, vector<64x8xbf16>
    %cst = arith.constant dense<0.000000e+00> : vector<64x512xf32>
    %3 = tpu.matmul %2, %1, %cst {dimension_numbers = #tpu.dot_dimension_numbers<[1], [0], [0], [1], [0, 0, 1, 1], [], []>} : vector<64x8xbf16>, vector<8x512xbf16>, vector<64x512xf32> -> vector<64x512xf32>
    %cst_3 = arith.constant 0.000000e+00 : f32
    %4 = vector.broadcast %cst_3 : f32 to vector<64x512xf32>
    %5 = arith.maximumf %3, %4 : vector<64x512xf32>
    %c0_4 = arith.constant 0 : index
    %c0_5 = arith.constant 0 : index
    %6 = vector.load %arg3[%c0_4, %c0_5] : memref<64x64xbf16, #tpu.memory_space<vmem>>, vector<64x64xbf16>
    %7 = arith.truncf %5 : vector<64x512xf32> to vector<64x512xbf16>
    %cst_6 = arith.constant dense<0.000000e+00> : vector<64x512xf32>
    %8 = tpu.matmul %6, %7, %cst_6 {dimension_numbers = #tpu.dot_dimension_numbers<[1], [0], [0], [1], [0, 0, 1, 1], [], []>} : vector<64x64xbf16>, vector<64x512xbf16>, vector<64x512xf32> -> vector<64x512xf32>
    %c0_7 = arith.constant 0 : index
    %c0_8 = arith.constant 0 : index
    %9 = vector.load %arg4[%c0_7, %c0_8] : memref<64x1xf32, #tpu.memory_space<vmem>>, vector<64x1xf32>
    %10 = vector.broadcast %9 : vector<64x1xf32> to vector<64x512xf32>
    %11 = arith.addf %8, %10 : vector<64x512xf32>
    %cst_9 = arith.constant 0.000000e+00 : f32
    %12 = vector.broadcast %cst_9 : f32 to vector<64x512xf32>
    %13 = arith.maximumf %11, %12 : vector<64x512xf32>
    %c0_10 = arith.constant 0 : index
    %c0_11 = arith.constant 0 : index
    %14 = vector.load %arg5[%c0_10, %c0_11] : memref<8x64xbf16, #tpu.memory_space<vmem>>, vector<8x64xbf16>
    %15 = arith.truncf %13 : vector<64x512xf32> to vector<64x512xbf16>
    %cst_12 = arith.constant dense<0.000000e+00> : vector<8x512xf32>
    %16 = tpu.matmul %14, %15, %cst_12 {dimension_numbers = #tpu.dot_dimension_numbers<[1], [0], [0], [1], [0, 0, 1, 1], [], []>} : vector<8x64xbf16>, vector<64x512xbf16>, vector<8x512xf32> -> vector<8x512xf32>
    %c0_13 = arith.constant 0 : index
    %c0_14 = arith.constant 0 : index
    %17 = vector.load %arg6[%c0_13, %c0_14] : memref<8x1xf32, #tpu.memory_space<vmem>>, vector<8x1xf32>
    %18 = vector.broadcast %17 : vector<8x1xf32> to vector<8x512xf32>
    %19 = arith.addf %16, %18 : vector<8x512xf32>
    %20 = math.absf %19 : vector<8x512xf32>
    %cst_15 = arith.constant 0.000000e+00 : f32
    %21 = vector.broadcast %cst_15 : f32 to vector<8x512xf32>
    %22 = arith.subf %21, %20 : vector<8x512xf32>
    %23 = math.exp %22 : vector<8x512xf32>
    %cst_16 = arith.constant 0.000000e+00 : f32
    %24 = vector.broadcast %cst_16 : f32 to vector<8x512xf32>
    %25 = arith.maximumf %19, %24 : vector<8x512xf32>
    %cst_17 = arith.constant 1.000000e+00 : f32
    %26 = vector.broadcast %cst_17 : f32 to vector<8x512xf32>
    %27 = arith.addf %26, %23 : vector<8x512xf32>
    %28 = math.log %27 : vector<8x512xf32>
    %29 = arith.addf %25, %28 : vector<8x512xf32>
    %cst_18 = arith.constant 0.000000e+00 : f32
    %30 = vector.broadcast %cst_18 : f32 to vector<8x512xf32>
    %31 = arith.cmpf oge, %19, %30 : vector<8x512xf32>
    %cst_19 = arith.constant 1.000000e+00 : f32
    %32 = vector.broadcast %cst_19 : f32 to vector<8x512xf32>
    %33 = arith.select %31, %32, %23 : vector<8x512xi1>, vector<8x512xf32>
    %cst_20 = arith.constant 1.000000e+00 : f32
    %34 = vector.broadcast %cst_20 : f32 to vector<8x512xf32>
    %35 = arith.addf %34, %23 : vector<8x512xf32>
    %36 = tpu.reciprocal %35 {approx = true} : vector<8x512xf32> -> vector<8x512xf32>
    %37 = arith.mulf %33, %36 : vector<8x512xf32>
    %38 = tpu.iota {dimensions = array<i32: 0>} : vector<8x512xi32>
    %c0_i32 = arith.constant 0 : i32
    %39 = vector.broadcast %c0_i32 : i32 to vector<8x512xi32>
    %40 = arith.cmpi eq, %38, %39 : vector<8x512xi32>
    %c4_i32 = arith.constant 4 : i32
    %41 = vector.broadcast %c4_i32 : i32 to vector<8x512xi32>
    %42 = arith.cmpi eq, %38, %41 : vector<8x512xi32>
    %43 = arith.ori %40, %42 : vector<8x512xi1>
    %44 = arith.select %43, %29, %37 : vector<8x512xi1>, vector<8x512xf32>
    %45 = vector.extract_strided_slice %44 {offsets = [0, 0], sizes = [1, 512], strides = [1, 1]} : vector<8x512xf32> to vector<1x512xf32>
    %46 = vector.extract_strided_slice %44 {offsets = [1, 0], sizes = [3, 512], strides = [1, 1]} : vector<8x512xf32> to vector<3x512xf32>
    %47 = vector.extract_strided_slice %44 {offsets = [4, 0], sizes = [1, 512], strides = [1, 1]} : vector<8x512xf32> to vector<1x512xf32>
    %48 = vector.extract_strided_slice %44 {offsets = [5, 0], sizes = [3, 512], strides = [1, 1]} : vector<8x512xf32> to vector<3x512xf32>
    %49 = arith.addf %45, %47 : vector<1x512xf32>
    %cst_21 = arith.constant 9.99999997E-7 : f32
    %50 = vector.broadcast %cst_21 : f32 to vector<1x512xf32>
    %51 = arith.addf %49, %50 : vector<1x512xf32>
    %52 = tpu.reciprocal %51 {approx = true} : vector<1x512xf32> -> vector<1x512xf32>
    %53 = vector.broadcast %45 : vector<1x512xf32> to vector<3x512xf32>
    %54 = arith.mulf %46, %53 : vector<3x512xf32>
    %55 = vector.broadcast %47 : vector<1x512xf32> to vector<3x512xf32>
    %56 = arith.mulf %48, %55 : vector<3x512xf32>
    %57 = arith.addf %54, %56 : vector<3x512xf32>
    %58 = vector.broadcast %52 : vector<1x512xf32> to vector<3x512xf32>
    %59 = arith.mulf %57, %58 : vector<3x512xf32>
    %60 = tpu.concatenate %59, %49, %46, %48, %45, %47 in 0 : vector<3x512xf32>, vector<1x512xf32>, vector<3x512xf32>, vector<3x512xf32>, vector<1x512xf32>, vector<1x512xf32> -> vector<12x512xf32>
    %c0_22 = arith.constant 0 : index
    %c0_23 = arith.constant 0 : index
    %61 = vector.load %arg7[%c0_22, %c0_23] : memref<12x512xf32, #tpu.memory_space<vmem>>, vector<12x512xf32>
    tpu.vector_store %arg7[%c0_22, %c0_23], %60 {strides = array<i32>} : memref<12x512xf32, #tpu.memory_space<vmem>>, vector<12x512xf32>,
    return
  }
  func.func @transform_0(%arg0: i32) -> (i32, i32) {
    %c0_i32 = arith.constant 0 : i32
    %c0_i32_0 = arith.constant 0 : i32
    return %c0_i32, %arg0 : i32, i32
  }
  func.func @transform_1(%arg0: i32) -> (i32, i32) {
    %c0_i32 = arith.constant 0 : i32
    %c0_i32_0 = arith.constant 0 : i32
    %c0_i32_1 = arith.constant 0 : i32
    return %c0_i32, %c0_i32_0 : i32, i32
  }
  func.func @transform_2(%arg0: i32) -> (i32, i32) {
    %c0_i32 = arith.constant 0 : i32
    %c0_i32_0 = arith.constant 0 : i32
    %c0_i32_1 = arith.constant 0 : i32
    return %c0_i32, %c0_i32_0 : i32, i32
  }
  func.func @transform_3(%arg0: i32) -> (i32, i32) {
    %c0_i32 = arith.constant 0 : i32
    %c0_i32_0 = arith.constant 0 : i32
    %c0_i32_1 = arith.constant 0 : i32
    return %c0_i32, %c0_i32_0 : i32, i32
  }
  func.func @transform_4(%arg0: i32) -> (i32, i32) {
    %c0_i32 = arith.constant 0 : i32
    %c0_i32_0 = arith.constant 0 : i32
    %c0_i32_1 = arith.constant 0 : i32
    return %c0_i32, %c0_i32_0 : i32, i32
  }
  func.func @transform_5(%arg0: i32) -> (i32, i32) {
    %c0_i32 = arith.constant 0 : i32
    %c0_i32_0 = arith.constant 0 : i32
    %c0_i32_1 = arith.constant 0 : i32
    return %c0_i32, %c0_i32_0 : i32, i32
  }
  func.func @transform_6(%arg0: i32) -> (i32, i32) {
    %c0_i32 = arith.constant 0 : i32
    %c0_i32_0 = arith.constant 0 : i32
    return %c0_i32, %arg0 : i32, i32
  }
}

</mosaic_0001>

<llo_original>
// kernel: hybrid_forward.1
$region0: #{hybrid_forward.1}
  #allocation0 [shape = 'u32[]', space=smem, size = 0x4, offset = 0x4, fixed_abs, tag = 'smem constant byte address 0x4 - core index']
  #allocation1 [shape = 'u32[72,128]{1,0:T(1,128)}', space=vmem, size = 0x9000, scoped, tag = 'internal scratch']
  %s0 = inlined_call_operand.vmem [shape: f32[8,1024], index: 0, kind: input, shape index: {}]
  %s1 = inlined_call_operand.vmem [shape: bf16[64,8], index: 1, kind: input, shape index: {}]
  %s2 = inlined_call_operand.vmem [shape: bf16[64,64], index: 2, kind: input, shape index: {}]
  %s3 = inlined_call_operand.vmem [shape: f32[64,1], index: 3, kind: input, shape index: {}]
  %s4 = inlined_call_operand.vmem [shape: bf16[8,64], index: 4, kind: input, shape index: {}]
  %s5 = inlined_call_operand.vmem [shape: f32[8,1], index: 5, kind: input, shape index: {}]
  %s6 = inlined_call_operand.vmem [shape: f32[12,1024], index: 6, kind: output, shape index: {}]
  %s7 = sld [smem:[#allocation0]]
  $region76: #{hybrid_forward.1} parent=0
    _
  %s9 = ssub.s32 1, %s7
  %s10 = scalar_select 0, %s9, %s7
  $region1: #{hybrid_forward.1} parent=0
    #allocation2 [shape = 'u8[65536]{0}', space=vmem, size = 0x10000, scoped, tag = 'output window, operand 0']
    loop: start=0, step=1, limit=4
    $region2: #{hybrid_forward.1} parent=1 // loop_pre_header
      _
    $region3: #{hybrid_forward.1} parent=1 // loop_header
      %s12 = sphi 0, %s16
      %p13 = scmp.ge.s32.totalorder %s12, 4
      %s22 = sphi 0, %s24
      %s25 = sphi 0, %s22
      %s26 = sphi 0, %s25
      %s42 = sphi 0, %s26
      %s46 = sphi 0, %s46
      %s48 = sphi 0, %s46
      %s49 = sphi 0, %s48
      %s63 = sphi 0, %s49
      %s67 = sphi 0, %s67
      %s69 = sphi 0, %s67
      %s70 = sphi 0, %s69
      %s84 = sphi 0, %s70
      %s88 = sphi 0, %s88
      %s90 = sphi 0, %s88
      %s91 = sphi 0, %s90
      %s105 = sphi 0, %s91
      %s109 = sphi 0, %s109
      %s111 = sphi 0, %s109
      %s112 = sphi 0, %s111
      %s126 = sphi 0, %s112
      %s130 = sphi 0, %s130
      %s132 = sphi 0, %s130
      %s133 = sphi 0, %s132
      %s147 = sphi 0, %s133
      %s153 = sphi 0, %s155
      %s156 = sphi 0, %s153
      %s157 = sphi 0, %s156
      %s173 = sphi 0, %s157
    $region4: #{hybrid_forward.1} parent=1 // loop_header_branch
      %15 = sbr.rel (%p13) target = $region8
    $region5: #{hybrid_forward.1} parent=1 // loop_body
      %s17 = ssub.s32 %s12, 1
      %s18 = ssub.s32 %s12, 2
      %s19 = sadd.s32 %s12, 1
      %s20 = ssub.s32 %s12, %s19
      %p21 = scmp.eq.s32.totalorder %s20, 0
      %s23 = sadd.s32 %s22, 1
      %s24 = scalar_select %p21, %s22, %s23
      %p27 = pneg %p21
      %p28 = scmp.eq.s32.totalorder %s12, 1
      %p29 = por %p27, %p28
      %p30 = scmp.ne.s32.totalorder %s22, %s25
      %p31 = scmp.eq.s32.totalorder %s12, 0
      %p32 = por %p30, %p31
      %p33 = scmp.ne.s32.totalorder %s22, %s25
      %p34 = scmp.eq.s32.totalorder %s17, 1
      %p35 = por %p33, %p34
      %p36 = scmp.ne.s32.totalorder %s25, %s26
      %p37 = scmp.eq.s32.totalorder %s17, 0
      %p38 = por %p36, %p37
      %p39 = scmp.ne.s32.totalorder %s25, %s26
      %p40 = scmp.eq.s32.totalorder %s18, 1
      %p41 = por %p39, %p40
      %p43 = scmp.ne.s32.totalorder %s26, %s42
      %p44 = scmp.eq.s32.totalorder %s18, 0
      %p45 = por %p43, %p44
      %s47 = sadd.s32 %s46, 1
      %p50 = scmp.eq.s32.totalorder %s12, 1
      %p51 = scmp.ne.s32.totalorder %s46, %s48
      %p52 = scmp.eq.s32.totalorder %s12, 0
      %p53 = por %p51, %p52
      %p54 = scmp.ne.s32.totalorder %s46, %s48
      %p55 = scmp.eq.s32.totalorder %s17, 1
      %p56 = por %p54, %p55
      %p57 = scmp.ne.s32.totalorder %s48, %s49
      %p58 = scmp.eq.s32.totalorder %s17, 0
      %p59 = por %p57, %p58
      %p60 = scmp.ne.s32.totalorder %s48, %s49
      %p61 = scmp.eq.s32.totalorder %s18, 1
      %p62 = por %p60, %p61
      %p64 = scmp.ne.s32.totalorder %s49, %s63
      %p65 = scmp.eq.s32.totalorder %s18, 0
      %p66 = por %p64, %p65
      %s68 = sadd.s32 %s67, 1
      %p71 = scmp.eq.s32.totalorder %s12, 1
      %p72 = scmp.ne.s32.totalorder %s67, %s69
      %p73 = scmp.eq.s32.totalorder %s12, 0
      %p74 = por %p72, %p73
      %p75 = scmp.ne.s32.totalorder %s67, %s69
      %p76 = scmp.eq.s32.totalorder %s17, 1
      %p77 = por %p75, %p76
      %p78 = scmp.ne.s32.totalorder %s69, %s70
      %p79 = scmp.eq.s32.totalorder %s17, 0
      %p80 = por %p78, %p79
      %p81 = scmp.ne.s32.totalorder %s69, %s70
      %p82 = scmp.eq.s32.totalorder %s18, 1
      %p83 = por %p81, %p82
      %p85 = scmp.ne.s32.totalorder %s70, %s84
      %p86 = scmp.eq.s32.totalorder %s18, 0
      %p87 = por %p85, %p86
      %s89 = sadd.s32 %s88, 1
      %p92 = scmp.eq.s32.totalorder %s12, 1
      %p93 = scmp.ne.s32.totalorder %s88, %s90
      %p94 = scmp.eq.s32.totalorder %s12, 0
      %p95 = por %p93, %p94
      %p96 = scmp.ne.s32.totalorder %s88, %s90
      %p97 = scmp.eq.s32.totalorder %s17, 1
      %p98 = por %p96, %p97
      %p99 = scmp.ne.s32.totalorder %s90, %s91
      %p100 = scmp.eq.s32.totalorder %s17, 0
      %p101 = por %p99, %p100
      %p102 = scmp.ne.s32.totalorder %s90, %s91
      %p103 = scmp.eq.s32.totalorder %s18, 1
      %p104 = por %p102, %p103
      %p106 = scmp.ne.s32.totalorder %s91, %s105
      %p107 = scmp.eq.s32.totalorder %s18, 0
      %p108 = por %p106, %p107
      %s110 = sadd.s32 %s109, 1
      %p113 = scmp.eq.s32.totalorder %s12, 1
      %p114 = scmp.ne.s32.totalorder %s109, %s111
      %p115 = scmp.eq.s32.totalorder %s12, 0
      %p116 = por %p114, %p115
      %p117 = scmp.ne.s32.totalorder %s109, %s111
      %p118 = scmp.eq.s32.totalorder %s17, 1
      %p119 = por %p117, %p118
      %p120 = scmp.ne.s32.totalorder %s111, %s112
      %p121 = scmp.eq.s32.totalorder %s17, 0
      %p122 = por %p120, %p121
      %p123 = scmp.ne.s32.totalorder %s111, %s112
      %p124 = scmp.eq.s32.totalorder %s18, 1
      %p125 = por %p123, %p124
      %p127 = scmp.ne.s32.totalorder %s112, %s126
      %p128 = scmp.eq.s32.totalorder %s18, 0
      %p129 = por %p127, %p128
      %s131 = sadd.s32 %s130, 1
      %p134 = scmp.eq.s32.totalorder %s12, 1
      %p135 = scmp.ne.s32.totalorder %s130, %s132
      %p136 = scmp.eq.s32.totalorder %s12, 0
      %p137 = por %p135, %p136
      %p138 = scmp.ne.s32.totalorder %s130, %s132
      %p139 = scmp.eq.s32.totalorder %s17, 1
      %p140 = por %p138, %p139
      %p141 = scmp.ne.s32.totalorder %s132, %s133
      %p142 = scmp.eq.s32.totalorder %s17, 0
      %p143 = por %p141, %p142
      %p144 = scmp.ne.s32.totalorder %s132, %s133
      %p145 = scmp.eq.s32.totalorder %s18, 1
      %p146 = por %p144, %p145
      %p148 = scmp.ne.s32.totalorder %s133, %s147
      %p149 = scmp.eq.s32.totalorder %s18, 0
      %p150 = por %p148, %p149
      %s151 = ssub.s32 %s12, %s19
      %p152 = scmp.eq.s32.totalorder %s151, 0
      %s154 = sadd.s32 %s153, 1
      %s155 = scalar_select %p152, %s153, %s154
      %p158 = pneg %p152
      %p159 = scmp.eq.s32.totalorder %s12, 1
      %p160 = por %p158, %p159
      %p161 = scmp.ne.s32.totalorder %s153, %s156
      %p162 = scmp.eq.s32.totalorder %s12, 0
      %p163 = por %p161, %p162
      %p164 = scmp.ne.s32.totalorder %s153, %s156
      %p165 = scmp.eq.s32.totalorder %s17, 1
      %p166 = por %p164, %p165
      %p167 = scmp.ne.s32.totalorder %s156, %s157
      %p168 = scmp.eq.s32.totalorder %s17, 0
      %p169 = por %p167, %p168
      %p170 = scmp.ne.s32.totalorder %s156, %s157
      %p171 = scmp.eq.s32.totalorder %s18, 1
      %p172 = por %p170, %p171
      %p174 = scmp.ne.s32.totalorder %s157, %s173
      %p175 = scmp.eq.s32.totalorder %s18, 0
      %p176 = por %p174, %p175
      %p177 = scmp.le.s32.totalorder 1, %s12
      %p178 = scmp.lt.s32.totalorder %s12, 3
      %p179 = pnand %p177, %p178
      %p180 = pneg %p179
      // Predicated region
      $region9: #{hybrid_forward.1} parent=5 // pred_check
        _
      $region10: #{hybrid_forward.1} parent=5 // pred_check_branch
        %182 = sbr.rel (%p179) target = $region12
      $region11: #{hybrid_forward.1} parent=5 // pred_region
        %s183 = ssub.s32 %s12, 1
        // Predicated region
        $region13: #{hybrid_forward.1} parent=11 // pred_check
          %p184 = pneg %p59
        $region14: #{hybrid_forward.1} parent=11 // pred_check_branch
          %186 = sbr.rel (%p184) target = $region16
        $region15: #{hybrid_forward.1} parent=11 // pred_region
          _
        $region16: #{hybrid_forward.1} parent=11 // pred_fallthru
          _
        // Predicated region
        $region17: #{hybrid_forward.1} parent=11 // pred_check
          %p187 = pneg %p80
        $region18: #{hybrid_forward.1} parent=11 // pred_check_branch
          %189 = sbr.rel (%p187) target = $region20
        $region19: #{hybrid_forward.1} parent=11 // pred_region
          _
        $region20: #{hybrid_forward.1} parent=11 // pred_fallthru
          _
        // Predicated region
        $region21: #{hybrid_forward.1} parent=11 // pred_check
          %p190 = pneg %p101
        $region22: #{hybrid_forward.1} parent=11 // pred_check_branch
          %192 = sbr.rel (%p190) target = $region24
        $region23: #{hybrid_forward.1} parent=11 // pred_region
          _
        $region24: #{hybrid_forward.1} parent=11 // pred_fallthru
          _
        // Predicated region
        $region25: #{hybrid_forward.1} parent=11 // pred_check
          %p193 = pneg %p122
        $region26: #{hybrid_forward.1} parent=11 // pred_check_branch
          %195 = sbr.rel (%p193) target = $region28
        $region27: #{hybrid_forward.1} parent=11 // pred_region
          _
        $region28: #{hybrid_forward.1} parent=11 // pred_fallthru
          _
        // Predicated region
        $region29: #{hybrid_forward.1} parent=11 // pred_check
          %p196 = pneg %p143
        $region30: #{hybrid_forward.1} parent=11 // pred_check_branch
          %198 = sbr.rel (%p196) target = $region32
        $region31: #{hybrid_forward.1} parent=11 // pred_region
          _
        $region32: #{hybrid_forward.1} parent=11 // pred_fallthru
          _
      $region12: #{hybrid_forward.1} parent=5 // pred_fallthru
        _
      %p199 = scmp.lt.s32.totalorder %s12, 2
      // Predicated region
      $region33: #{hybrid_forward.1} parent=5 // pred_check
        %p200 = pneg %p199
      $region34: #{hybrid_forward.1} parent=5 // pred_check_branch
        %202 = sbr.rel (%p200) target = $region36
      $region35: #{hybrid_forward.1} parent=5 // pred_region
        // Predicated region
        $region37: #{hybrid_forward.1} parent=35 // pred_check
          %p203 = pneg %p32
        $region38: #{hybrid_forward.1} parent=35 // pred_check_branch
          %205 = sbr.rel (%p203) target = $region40
        $region39: #{hybrid_forward.1} parent=35 // pred_region
          %s206 = smul.u32 4, %s12
          %p207 = scmp.lt.s32.totalorder %s206, 7
          %s208 = scalar_select %p207, %s206, 7
          %s209 = smul.addr %s208, 8
          %s210 = scalar_lea.vmem %s0, %s209
          %s211 = smul.u32 4, %s12
        $region40: #{hybrid_forward.1} parent=35 // pred_fallthru
          _
      $region36: #{hybrid_forward.1} parent=5 // pred_fallthru
        _
      %p212 = scmp.le.s32.totalorder 1, %s12
      %p213 = scmp.lt.s32.totalorder %s12, 3
      %p214 = pnand %p212, %p213
      %p215 = pneg %p214
      // Predicated region
      $region41: #{hybrid_forward.1} parent=5 // pred_check
        _
      $region42: #{hybrid_forward.1} parent=5 // pred_check_branch
        %217 = sbr.rel (%p214) target = $region44
      $region43: #{hybrid_forward.1} parent=5 // pred_region
        %s218 = ssub.s32 %s12, 1
        %s219 = smul.u32 4, %s17
        %p220 = scmp.lt.s32.totalorder %s219, 7
        %s221 = scalar_select %p220, %s219, 7
        %s222 = smul.addr %s221, 8
        %s223 = scalar_lea.vmem %s0, %s222
        %p224 = pneg %p38
        %p225 = pneg %p35
        %p226 = pneg %p59
        %p227 = pneg %p56
        %p228 = pneg %p80
        %p229 = pneg %p77
        %p230 = pneg %p101
        %p231 = pneg %p98
        %p232 = pneg %p122
        %p233 = pneg %p119
        %p234 = pneg %p143
        %p235 = pneg %p140
        %p236 = pneg %p169
        %p237 = pneg %p166
        %s238 = sand.u32 %s156, 1
        %s239 = sand.u32 %s156, 1
        %s240 = smul.addr %s239, 64
        %s241 = scalar_lea.vmem [#allocation2], %s240
        %s242 = smul.u32 4, %s17
        %p243 = scmp.lt.s32.totalorder %s242, 7
        %s244 = scalar_select %p243, %s242, 7
        %s245 = smul.addr %s244, 8
        %s246 = scalar_lea.vmem %s0, %s245
        %s247 = smul.u32 4, %s17
        %s248 = smul.u32 4, %s17
        %v250 = vld [vmem:[%s246] sm:$0xff]
        %v251 = vld [vmem:[%s246 + $0x8] sm:$0xff]
        %v252 = vld [vmem:[%s246 + $0x10] sm:$0xff]
        %v253 = vld [vmem:[%s246 + $0x18] sm:$0xff]
        %v254 = vpack.c.bf16 %v250, %v250
        %v255 = vpack.c.bf16 %v251, %v251
        %v256 = vpack.c.bf16 %v252, %v252
        %v257 = vpack.c.bf16 %v253, %v253
        %v258 = vld [vmem:[%s1] sm:$0xf]
        %v259 = vld [vmem:[%s1 + $0x4] sm:$0xf]
        %v260 = vld [vmem:[%s1 + $0x8] sm:$0xf]
        %v261 = vld [vmem:[%s1 + $0xc] sm:$0xf]
        %v262 = vld [vmem:[%s1 + $0x10] sm:$0xf]
        %v263 = vld [vmem:[%s1 + $0x14] sm:$0xf]
        %v264 = vld [vmem:[%s1 + $0x18] sm:$0xf]
        %v265 = vld [vmem:[%s1 + $0x1c] sm:$0xf]
        %v274 = vunpack.c.l.b16 %v258
        %v275 = vunpack.c.l.b16 %v259
        %v276 = vunpack.c.l.b16 %v260
        %v277 = vunpack.c.l.b16 %v261
        %v278 = vunpack.c.l.b16 %v262
        %v279 = vunpack.c.l.b16 %v263
        %v280 = vunpack.c.l.b16 %v264
        %v281 = vunpack.c.l.b16 %v265
        %v282 = vpack.c.b16 %v275, %v274
        %v283 = vpack.c.b16 %v277, %v276
        %v284 = vpack.c.b16 %v279, %v278
        %v285 = vpack.c.b16 %v281, %v280
        %vm286 = vcmask 64512
        %v288 = vsel %vm286, %v282, 0
        %v291 = vsel %vm286, %v283, 0
        %v294 = vsel %vm286, %v284, 0
        %v297 = vsel %vm286, %v285, 0
        %vm299 = vcmask 1043456
        %v301 = vsel %vm299, %v254, 0
        %v304 = vsel %vm299, %v255, 0
        %v307 = vsel %vm299, %v256, 0
        %v310 = vsel %vm299, %v257, 0
        %312 = vmatpush.bf16.msra.mxu0 0
        %313 = vmatpush.bf16.msra.mxu0 0
        %314 = vmatpush.bf16.msra.mxu0 0
        %315 = vmatpush.bf16.msra.mxu0 0
        %316 = vmatpush.bf16.msra.mxu0 0
        %317 = vmatpush.bf16.msra.mxu0 0
        %318 = vmatpush.bf16.msra.mxu0 0
        %319 = vmatpush.bf16.msra.mxu0 %v301
        %320 = vmatmul.bf16.gmra.mxu0 %v288
        %v321 = vpop.f32.mrf.mxu0
        %v322 = vadd.f32 0.0, %v321
        %v323 = vpop.f32.mrf.mxu0
        %v324 = vadd.f32 0.0, %v323
        %325 = vmatmul.bf16.gmra.mxu0 %v291
        %v326 = vpop.f32.mrf.mxu0
        %v327 = vadd.f32 0.0, %v326
        %v328 = vpop.f32.mrf.mxu0
        %v329 = vadd.f32 0.0, %v328
        %330 = vmatmul.bf16.gmra.mxu0 %v294
        %v331 = vpop.f32.mrf.mxu0
        %v332 = vadd.f32 0.0, %v331
        %v333 = vpop.f32.mrf.mxu0
        %v334 = vadd.f32 0.0, %v333
        %335 = vmatmul.bf16.gmra.mxu0 %v297
        %v336 = vpop.f32.mrf.mxu0
        %v337 = vadd.f32 0.0, %v336
        %v338 = vpop.f32.mrf.mxu0
        %v339 = vadd.f32 0.0, %v338
        %340 = vdwg.mxu0
        %341 = vmatpush.bf16.msra.mxu0 0
        %342 = vmatpush.bf16.msra.mxu0 0
        %343 = vmatpush.bf16.msra.mxu0 0
        %344 = vmatpush.bf16.msra.mxu0 0
        %345 = vmatpush.bf16.msra.mxu0 0
        %346 = vmatpush.bf16.msra.mxu0 0
        %347 = vmatpush.bf16.msra.mxu0 0
        %348 = vmatpush.bf16.msra.mxu0 %v304
        %349 = vmatmul.bf16.gmra.mxu0 %v288
        %v350 = vpop.f32.mrf.mxu0
        %v351 = vadd.f32 0.0, %v350
        %v352 = vpop.f32.mrf.mxu0
        %v353 = vadd.f32 0.0, %v352
        %354 = vmatmul.bf16.gmra.mxu0 %v291
        %v355 = vpop.f32.mrf.mxu0
        %v356 = vadd.f32 0.0, %v355
        %v357 = vpop.f32.mrf.mxu0
        %v358 = vadd.f32 0.0, %v357
        %359 = vmatmul.bf16.gmra.mxu0 %v294
        %v360 = vpop.f32.mrf.mxu0
        %v361 = vadd.f32 0.0, %v360
        %v362 = vpop.f32.mrf.mxu0
        %v363 = vadd.f32 0.0, %v362
        %364 = vmatmul.bf16.gmra.mxu0 %v297
        %v365 = vpop.f32.mrf.mxu0
        %v366 = vadd.f32 0.0, %v365
        %v367 = vpop.f32.mrf.mxu0
        %v368 = vadd.f32 0.0, %v367
        %369 = vdwg.mxu0
        %370 = vmatpush.bf16.msra.mxu0 0
        %371 = vmatpush.bf16.msra.mxu0 0
        %372 = vmatpush.bf16.msra.mxu0 0
        %373 = vmatpush.bf16.msra.mxu0 0
        %374 = vmatpush.bf16.msra.mxu0 0
        %375 = vmatpush.bf16.msra.mxu0 0
        %376 = vmatpush.bf16.msra.mxu0 0
        %377 = vmatpush.bf16.msra.mxu0 %v307
        %378 = vmatmul.bf16.gmra.mxu0 %v288
        %v379 = vpop.f32.mrf.mxu0
        %v380 = vadd.f32 0.0, %v379
        %v381 = vpop.f32.mrf.mxu0
        %v382 = vadd.f32 0.0, %v381
        %383 = vmatmul.bf16.gmra.mxu0 %v291
        %v384 = vpop.f32.mrf.mxu0
        %v385 = vadd.f32 0.0, %v384
        %v386 = vpop.f32.mrf.mxu0
        %v387 = vadd.f32 0.0, %v386
        %388 = vmatmul.bf16.gmra.mxu0 %v294
        %v389 = vpop.f32.mrf.mxu0
        %v390 = vadd.f32 0.0, %v389
        %v391 = vpop.f32.mrf.mxu0
        %v392 = vadd.f32 0.0, %v391
        %393 = vmatmul.bf16.gmra.mxu0 %v297
        %v394 = vpop.f32.mrf.mxu0
        %v395 = vadd.f32 0.0, %v394
        %v396 = vpop.f32.mrf.mxu0
        %v397 = vadd.f32 0.0, %v396
        %398 = vdwg.mxu0
        %399 = vmatpush.bf16.msra.mxu0 0
        %400 = vmatpush.bf16.msra.mxu0 0
        %401 = vmatpush.bf16.msra.mxu0 0
        %402 = vmatpush.bf16.msra.mxu0 0
        %403 = vmatpush.bf16.msra.mxu0 0
        %404 = vmatpush.bf16.msra.mxu0 0
        %405 = vmatpush.bf16.msra.mxu0 0
        %406 = vmatpush.bf16.msra.mxu0 %v310
        %407 = vmatmul.bf16.gmra.mxu0 %v288
        %v408 = vpop.f32.mrf.mxu0
        %v409 = vadd.f32 0.0, %v408
        %v410 = vpop.f32.mrf.mxu0
        %v411 = vadd.f32 0.0, %v410
        %412 = vmatmul.bf16.gmra.mxu0 %v291
        %v413 = vpop.f32.mrf.mxu0
        %v414 = vadd.f32 0.0, %v413
        %v415 = vpop.f32.mrf.mxu0
        %v416 = vadd.f32 0.0, %v415
        %417 = vmatmul.bf16.gmra.mxu0 %v294
        %v418 = vpop.f32.mrf.mxu0
        %v419 = vadd.f32 0.0, %v418
        %v420 = vpop.f32.mrf.mxu0
        %v421 = vadd.f32 0.0, %v420
        %422 = vmatmul.bf16.gmra.mxu0 %v297
        %v423 = vpop.f32.mrf.mxu0
        %v424 = vadd.f32 0.0, %v423
        %v425 = vpop.f32.mrf.mxu0
        %v426 = vadd.f32 0.0, %v425
        %427 = vdwg.mxu0
        %v428 = vmax.f32 %v322, 0.0
        %v429 = vmax.f32 %v351, 0.0
        %v430 = vmax.f32 %v380, 0.0
        %v431 = vmax.f32 %v409, 0.0
        %v432 = vmax.f32 %v324, 0.0
        %v433 = vmax.f32 %v353, 0.0
        %v434 = vmax.f32 %v382, 0.0
        %v435 = vmax.f32 %v411, 0.0
        %v436 = vmax.f32 %v327, 0.0
        %v437 = vmax.f32 %v356, 0.0
        %v438 = vmax.f32 %v385, 0.0
        %v439 = vmax.f32 %v414, 0.0
        %v440 = vmax.f32 %v329, 0.0
        %v441 = vmax.f32 %v358, 0.0
        %v442 = vmax.f32 %v387, 0.0
        %v443 = vmax.f32 %v416, 0.0
        %v444 = vmax.f32 %v332, 0.0
        %v445 = vmax.f32 %v361, 0.0
        %v446 = vmax.f32 %v390, 0.0
        %v447 = vmax.f32 %v419, 0.0
        %v448 = vmax.f32 %v334, 0.0
        %v449 = vmax.f32 %v363, 0.0
        %v450 = vmax.f32 %v392, 0.0
        %v451 = vmax.f32 %v421, 0.0
        %v452 = vmax.f32 %v337, 0.0
        %v453 = vmax.f32 %v366, 0.0
        %v454 = vmax.f32 %v395, 0.0
        %v455 = vmax.f32 %v424, 0.0
        %v456 = vmax.f32 %v339, 0.0
        %v457 = vmax.f32 %v368, 0.0
        %v458 = vmax.f32 %v397, 0.0
        %v459 = vmax.f32 %v426, 0.0
        %v460 = vld [vmem:[%s2] sm:$0xf]
        %v461 = vld [vmem:[%s2 + $0x4] sm:$0xf]
        %v462 = vld [vmem:[%s2 + $0x8] sm:$0xf]
        %v463 = vld [vmem:[%s2 + $0xc] sm:$0xf]
        %v464 = vld [vmem:[%s2 + $0x10] sm:$0xf]
        %v465 = vld [vmem:[%s2 + $0x14] sm:$0xf]
        %v466 = vld [vmem:[%s2 + $0x18] sm:$0xf]
        %v467 = vld [vmem:[%s2 + $0x1c] sm:$0xf]
        %v468 = vpack.c.bf16 %v432, %v428
        %v469 = vpack.c.bf16 %v433, %v429
        %v470 = vpack.c.bf16 %v434, %v430
        %v471 = vpack.c.bf16 %v435, %v431
        %v472 = vpack.c.bf16 %v440, %v436
        %v473 = vpack.c.bf16 %v441, %v437
        %v474 = vpack.c.bf16 %v442, %v438
        %v475 = vpack.c.bf16 %v443, %v439
        %v476 = vpack.c.bf16 %v448, %v444
        %v477 = vpack.c.bf16 %v449, %v445
        %v478 = vpack.c.bf16 %v450, %v446
        %v479 = vpack.c.bf16 %v451, %v447
        %v480 = vpack.c.bf16 %v456, %v452
        %v481 = vpack.c.bf16 %v457, %v453
        %v482 = vpack.c.bf16 %v458, %v454
        %v483 = vpack.c.bf16 %v459, %v455
        %v484 = vld [vmem:[%s3] sm:$0xff]
        %v485 = vld [vmem:[%s3 + $0x8] sm:$0xff]
        %v486 = vld [vmem:[%s3 + $0x10] sm:$0xff]
        %v487 = vld [vmem:[%s3 + $0x18] sm:$0xff]
        %v488 = vld [vmem:[%s3 + $0x20] sm:$0xff]
        %v489 = vld [vmem:[%s3 + $0x28] sm:$0xff]
        %v490 = vld [vmem:[%s3 + $0x30] sm:$0xff]
        %v491 = vld [vmem:[%s3 + $0x38] sm:$0xff]
        %493 = vset.pattern.permute.xlu0 0
        %494 = vperm.xlu0 %493, %v484
        %v495 = vpop.permute.xlu0 %494
        %498 = vset.pattern.permute.xlu0 0
        %499 = vperm.xlu0 %498, %v485
        %v500 = vpop.permute.xlu0 %499
        %503 = vset.pattern.permute.xlu0 0
        %504 = vperm.xlu0 %503, %v486
        %v505 = vpop.permute.xlu0 %504
        %508 = vset.pattern.permute.xlu0 0
        %509 = vperm.xlu0 %508, %v487
        %v510 = vpop.permute.xlu0 %509
        %513 = vset.pattern.permute.xlu0 0
        %514 = vperm.xlu0 %513, %v488
        %v515 = vpop.permute.xlu0 %514
        %518 = vset.pattern.permute.xlu0 0
        %519 = vperm.xlu0 %518, %v489
        %v520 = vpop.permute.xlu0 %519
        %523 = vset.pattern.permute.xlu0 0
        %524 = vperm.xlu0 %523, %v490
        %v525 = vpop.permute.xlu0 %524
        %528 = vset.pattern.permute.xlu0 0
        %529 = vperm.xlu0 %528, %v491
        %v530 = vpop.permute.xlu0 %529
        %v540 = vunpack.c.l.b16 %v460
        %v541 = vunpack.c.l.b16 %v461
        %v542 = vunpack.c.l.b16 %v462
        %v543 = vunpack.c.l.b16 %v463
        %v544 = vunpack.c.l.b16 %v464
        %v545 = vunpack.c.l.b16 %v465
        %v546 = vunpack.c.l.b16 %v466
        %v547 = vunpack.c.l.b16 %v467
        %v548 = vpack.c.b16 %v541, %v540
        %v549 = vpack.c.b16 %v543, %v542
        %v550 = vpack.c.b16 %v545, %v544
        %v551 = vpack.c.b16 %v547, %v546
        %vm552 = vcmask 523264
        %v554 = vsel %vm552, %v548, 0
        %v557 = vsel %vm552, %v549, 0
        %v560 = vsel %vm552, %v550, 0
        %v563 = vsel %vm552, %v551, 0
        %565 = vmatpush.bf16.msra.mxu0 0
        %566 = vmatpush.bf16.msra.mxu0 0
        %567 = vmatpush.bf16.msra.mxu0 0
        %568 = vmatpush.bf16.msra.mxu0 0
        %569 = vmatpush.bf16.msra.mxu0 %v480
        %570 = vmatpush.bf16.msra.mxu0 %v476
        %571 = vmatpush.bf16.msra.mxu0 %v472
        %572 = vmatpush.bf16.msra.mxu0 %v468
        %573 = vmatmul.bf16.gmra.mxu0 %v554
        %v574 = vpop.f32.mrf.mxu0
        %v575 = vadd.f32 %v495, %v574
        %v576 = vpop.f32.mrf.mxu0
        %v577 = vadd.f32 %v500, %v576
        %578 = vmatmul.bf16.gmra.mxu0 %v557
        %v579 = vpop.f32.mrf.mxu0
        %v580 = vadd.f32 %v505, %v579
        %v581 = vpop.f32.mrf.mxu0
        %v582 = vadd.f32 %v510, %v581
        %583 = vmatmul.bf16.gmra.mxu0 %v560
        %v584 = vpop.f32.mrf.mxu0
        %v585 = vadd.f32 %v515, %v584
        %v586 = vpop.f32.mrf.mxu0
        %v587 = vadd.f32 %v520, %v586
        %588 = vmatmul.bf16.gmra.mxu0 %v563
        %v589 = vpop.f32.mrf.mxu0
        %v590 = vadd.f32 %v525, %v589
        %v591 = vpop.f32.mrf.mxu0
        %v592 = vadd.f32 %v530, %v591
        %593 = vdwg.mxu0
        %594 = vmatpush.bf16.msra.mxu0 0
        %595 = vmatpush.bf16.msra.mxu0 0
        %596 = vmatpush.bf16.msra.mxu0 0
        %597 = vmatpush.bf16.msra.mxu0 0
        %598 = vmatpush.bf16.msra.mxu0 %v481
        %599 = vmatpush.bf16.msra.mxu0 %v477
        %600 = vmatpush.bf16.msra.mxu0 %v473
        %601 = vmatpush.bf16.msra.mxu0 %v469
        %602 = vmatmul.bf16.gmra.mxu0 %v554
        %v603 = vpop.f32.mrf.mxu0
        %v604 = vadd.f32 %v495, %v603
        %v605 = vpop.f32.mrf.mxu0
        %v606 = vadd.f32 %v500, %v605
        %607 = vmatmul.bf16.gmra.mxu0 %v557
        %v608 = vpop.f32.mrf.mxu0
        %v609 = vadd.f32 %v505, %v608
        %v610 = vpop.f32.mrf.mxu0
        %v611 = vadd.f32 %v510, %v610
        %612 = vmatmul.bf16.gmra.mxu0 %v560
        %v613 = vpop.f32.mrf.mxu0
        %v614 = vadd.f32 %v515, %v613
        %v615 = vpop.f32.mrf.mxu0
        %v616 = vadd.f32 %v520, %v615
        %617 = vmatmul.bf16.gmra.mxu0 %v563
        %v618 = vpop.f32.mrf.mxu0
        %v619 = vadd.f32 %v525, %v618
        %v620 = vpop.f32.mrf.mxu0
        %v621 = vadd.f32 %v530, %v620
        %622 = vdwg.mxu0
        %623 = vmatpush.bf16.msra.mxu0 0
        %624 = vmatpush.bf16.msra.mxu0 0
        %625 = vmatpush.bf16.msra.mxu0 0
        %626 = vmatpush.bf16.msra.mxu0 0
        %627 = vmatpush.bf16.msra.mxu0 %v482
        %628 = vmatpush.bf16.msra.mxu0 %v478
        %629 = vmatpush.bf16.msra.mxu0 %v474
        %630 = vmatpush.bf16.msra.mxu0 %v470
        %631 = vmatmul.bf16.gmra.mxu0 %v554
        %v632 = vpop.f32.mrf.mxu0
        %v633 = vadd.f32 %v495, %v632
        %v634 = vpop.f32.mrf.mxu0
        %v635 = vadd.f32 %v500, %v634
        %636 = vmatmul.bf16.gmra.mxu0 %v557
        %v637 = vpop.f32.mrf.mxu0
        %v638 = vadd.f32 %v505, %v637
        %v639 = vpop.f32.mrf.mxu0
        %v640 = vadd.f32 %v510, %v639
        %641 = vmatmul.bf16.gmra.mxu0 %v560
        %v642 = vpop.f32.mrf.mxu0
        %v643 = vadd.f32 %v515, %v642
        %v644 = vpop.f32.mrf.mxu0
        %v645 = vadd.f32 %v520, %v644
        %646 = vmatmul.bf16.gmra.mxu0 %v563
        %v647 = vpop.f32.mrf.mxu0
        %v648 = vadd.f32 %v525, %v647
        %v649 = vpop.f32.mrf.mxu0
        %v650 = vadd.f32 %v530, %v649
        %651 = vdwg.mxu0
        %652 = vmatpush.bf16.msra.mxu0 0
        %653 = vmatpush.bf16.msra.mxu0 0
        %654 = vmatpush.bf16.msra.mxu0 0
        %655 = vmatpush.bf16.msra.mxu0 0
        %656 = vmatpush.bf16.msra.mxu0 %v483
        %657 = vmatpush.bf16.msra.mxu0 %v479
        %658 = vmatpush.bf16.msra.mxu0 %v475
        %659 = vmatpush.bf16.msra.mxu0 %v471
        %660 = vmatmul.bf16.gmra.mxu0 %v554
        %v661 = vpop.f32.mrf.mxu0
        %v662 = vadd.f32 %v495, %v661
        %v663 = vpop.f32.mrf.mxu0
        %v664 = vadd.f32 %v500, %v663
        %665 = vmatmul.bf16.gmra.mxu0 %v557
        %v666 = vpop.f32.mrf.mxu0
        %v667 = vadd.f32 %v505, %v666
        %v668 = vpop.f32.mrf.mxu0
        %v669 = vadd.f32 %v510, %v668
        %670 = vmatmul.bf16.gmra.mxu0 %v560
        %v671 = vpop.f32.mrf.mxu0
        %v672 = vadd.f32 %v515, %v671
        %v673 = vpop.f32.mrf.mxu0
        %v674 = vadd.f32 %v520, %v673
        %675 = vmatmul.bf16.gmra.mxu0 %v563
        %v676 = vpop.f32.mrf.mxu0
        %v677 = vadd.f32 %v525, %v676
        %v678 = vpop.f32.mrf.mxu0
        %v679 = vadd.f32 %v530, %v678
        %680 = vdwg.mxu0
        %v681 = vmax.f32 %v575, 0.0
        %v682 = vmax.f32 %v604, 0.0
        %v683 = vmax.f32 %v633, 0.0
        %v684 = vmax.f32 %v662, 0.0
        %v685 = vmax.f32 %v577, 0.0
        %v686 = vmax.f32 %v606, 0.0
        %v687 = vmax.f32 %v635, 0.0
        %v688 = vmax.f32 %v664, 0.0
        %v689 = vmax.f32 %v580, 0.0
        %v690 = vmax.f32 %v609, 0.0
        %v691 = vmax.f32 %v638, 0.0
        %v692 = vmax.f32 %v667, 0.0
        %v693 = vmax.f32 %v582, 0.0
        %v694 = vmax.f32 %v611, 0.0
        %v695 = vmax.f32 %v640, 0.0
        %v696 = vmax.f32 %v669, 0.0
        %v697 = vmax.f32 %v585, 0.0
        %v698 = vmax.f32 %v614, 0.0
        %v699 = vmax.f32 %v643, 0.0
        %v700 = vmax.f32 %v672, 0.0
        %v701 = vmax.f32 %v587, 0.0
        %v702 = vmax.f32 %v616, 0.0
        %v703 = vmax.f32 %v645, 0.0
        %v704 = vmax.f32 %v674, 0.0
        %v705 = vmax.f32 %v590, 0.0
        %v706 = vmax.f32 %v619, 0.0
        %v707 = vmax.f32 %v648, 0.0
        %v708 = vmax.f32 %v677, 0.0
        %v709 = vmax.f32 %v592, 0.0
        %v710 = vmax.f32 %v621, 0.0
        %v711 = vmax.f32 %v650, 0.0
        %v712 = vmax.f32 %v679, 0.0
        %v713 = vld [vmem:[%s4] sm:$0xf]
        %v714 = vpack.c.bf16 %v685, %v681
        %v715 = vpack.c.bf16 %v686, %v682
        %v716 = vpack.c.bf16 %v687, %v683
        %v717 = vpack.c.bf16 %v688, %v684
        %v718 = vpack.c.bf16 %v693, %v689
        %v719 = vpack.c.bf16 %v694, %v690
        %v720 = vpack.c.bf16 %v695, %v691
        %v721 = vpack.c.bf16 %v696, %v692
        %v722 = vpack.c.bf16 %v701, %v697
        %v723 = vpack.c.bf16 %v702, %v698
        %v724 = vpack.c.bf16 %v703, %v699
        %v725 = vpack.c.bf16 %v704, %v700
        %v726 = vpack.c.bf16 %v709, %v705
        %v727 = vpack.c.bf16 %v710, %v706
        %v728 = vpack.c.bf16 %v711, %v707
        %v729 = vpack.c.bf16 %v712, %v708
        %v730 = vld [vmem:[%s5] sm:$0xff]
        %732 = vset.pattern.permute.xlu0 0
        %733 = vperm.xlu0 %732, %v730
        %v734 = vpop.permute.xlu0 %733
        %v737 = vsel %vm552, %v713, 0
        %739 = vmatpush.bf16.msra.mxu0 0
        %740 = vmatpush.bf16.msra.mxu0 0
        %741 = vmatpush.bf16.msra.mxu0 0
        %742 = vmatpush.bf16.msra.mxu0 0
        %743 = vmatpush.bf16.msra.mxu0 %v726
        %744 = vmatpush.bf16.msra.mxu0 %v722
        %745 = vmatpush.bf16.msra.mxu0 %v718
        %746 = vmatpush.bf16.msra.mxu0 %v714
        %747 = vmatmul.bf16.gmra.mxu0 %v737
        %v748 = vpop.f32.mrf.mxu0
        %v749 = vadd.f32 %v734, %v748
        %v750 = vpop.f32.mrf.mxu0
        %751 = vdwg.mxu0
        %752 = vmatpush.bf16.msra.mxu0 0
        %753 = vmatpush.bf16.msra.mxu0 0
        %754 = vmatpush.bf16.msra.mxu0 0
        %755 = vmatpush.bf16.msra.mxu0 0
        %756 = vmatpush.bf16.msra.mxu0 %v727
        %757 = vmatpush.bf16.msra.mxu0 %v723
        %758 = vmatpush.bf16.msra.mxu0 %v719
        %759 = vmatpush.bf16.msra.mxu0 %v715
        %760 = vmatmul.bf16.gmra.mxu0 %v737
        %v761 = vpop.f32.mrf.mxu0
        %v762 = vadd.f32 %v734, %v761
        %v763 = vpop.f32.mrf.mxu0
        %764 = vdwg.mxu0
        %765 = vmatpush.bf16.msra.mxu0 0
        %766 = vmatpush.bf16.msra.mxu0 0
        %767 = vmatpush.bf16.msra.mxu0 0
        %768 = vmatpush.bf16.msra.mxu0 0
        %769 = vmatpush.bf16.msra.mxu0 %v728
        %770 = vmatpush.bf16.msra.mxu0 %v724
        %771 = vmatpush.bf16.msra.mxu0 %v720
        %772 = vmatpush.bf16.msra.mxu0 %v716
        %773 = vmatmul.bf16.gmra.mxu0 %v737
        %v774 = vpop.f32.mrf.mxu0
        %v775 = vadd.f32 %v734, %v774
        %v776 = vpop.f32.mrf.mxu0
        %777 = vdwg.mxu0
        %778 = vmatpush.bf16.msra.mxu0 0
        %779 = vmatpush.bf16.msra.mxu0 0
        %780 = vmatpush.bf16.msra.mxu0 0
        %781 = vmatpush.bf16.msra.mxu0 0
        %782 = vmatpush.bf16.msra.mxu0 %v729
        %783 = vmatpush.bf16.msra.mxu0 %v725
        %784 = vmatpush.bf16.msra.mxu0 %v721
        %785 = vmatpush.bf16.msra.mxu0 %v717
        %786 = vmatmul.bf16.gmra.mxu0 %v737
        %v787 = vpop.f32.mrf.mxu0
        %v788 = vadd.f32 %v734, %v787
        %v789 = vpop.f32.mrf.mxu0
        %790 = vdwg.mxu0
        %v791 = vand.u32 2147483647, %v749
        %v792 = vand.u32 2147483647, %v762
        %v793 = vand.u32 2147483647, %v775
        %v794 = vand.u32 2147483647, %v788
        %v795 = vsub.f32 0.0, %v791
        %v796 = vsub.f32 0.0, %v792
        %v797 = vsub.f32 0.0, %v793
        %v798 = vsub.f32 0.0, %v794
        %v799 = vmul.f32 %v795, 1.442695
        %v800 = vpow.pop %v799
        %v801 = vmul.f32 %v796, 1.442695
        %v802 = vpow.pop %v801
        %v803 = vmul.f32 %v797, 1.442695
        %v804 = vpow.pop %v803
        %v805 = vmul.f32 %v798, 1.442695
        %v806 = vpow.pop %v805
        %v807 = vmax.f32 %v749, 0.0
        %v808 = vmax.f32 %v762, 0.0
        %v809 = vmax.f32 %v775, 0.0
        %v810 = vmax.f32 %v788, 0.0
        %v811 = vadd.f32 %v800, 1.0
        %v812 = vadd.f32 %v802, 1.0
        %v813 = vadd.f32 %v804, 1.0
        %v814 = vadd.f32 %v806, 1.0
        %v815 = vlog2.pop %v811
        %v816 = vmul.f32 %v815, 0.6931472
        %v817 = vlog2.pop %v812
        %v818 = vmul.f32 %v817, 0.6931472
        %v819 = vlog2.pop %v813
        %v820 = vmul.f32 %v819, 0.6931472
        %v821 = vlog2.pop %v814
        %v822 = vmul.f32 %v821, 0.6931472
        %v823 = vadd.f32 %v807, %v816
        %v824 = vadd.f32 %v808, %v818
        %v825 = vadd.f32 %v809, %v820
        %v826 = vadd.f32 %v810, %v822
        %vm827 = vcmp.ge.f32.partialorder %v749, 0.0
        %vm828 = vcmp.ge.f32.partialorder %v762, 0.0
        %vm829 = vcmp.ge.f32.partialorder %v775, 0.0
        %vm830 = vcmp.ge.f32.partialorder %v788, 0.0
        %v831 = vsel %vm827, 1.0, %v800
        %v832 = vsel %vm828, 1.0, %v802
        %v833 = vsel %vm829, 1.0, %v804
        %v834 = vsel %vm830, 1.0, %v806
        %v835 = vrcp.pop %v811
        %v836 = vrcp.pop %v812
        %v837 = vrcp.pop %v813
        %v838 = vrcp.pop %v814
        %v839 = vmul.f32 %v831, %v835
        %v840 = vmul.f32 %v832, %v836
        %v841 = vmul.f32 %v833, %v837
        %v842 = vmul.f32 %v834, %v838
        %v843 = vlaneseq
        %v844 = vshrl.u32 %v843, 7
        %vm845 = vcmp.eq.s32.totalorder %v844, 0
        %vm846 = vcmp.eq.s32.totalorder %v844, 4
        %vm847 = vmor %vm845, %vm846
        %v848 = vsel %vm847, %v823, %v839
        %v849 = vsel %vm847, %v824, %v840
        %v850 = vsel %vm847, %v825, %v841
        %v851 = vsel %vm847, %v826, %v842
        %v856 = vrot.slane %v848, 4
        %v857 = vrot.slane %v849, 4
        %v858 = vrot.slane %v850, 4
        %v859 = vrot.slane %v851, 4
        %v864 = vadd.f32 %v848, %v856
        %v865 = vadd.f32 %v849, %v857
        %v866 = vadd.f32 %v850, %v858
        %v867 = vadd.f32 %v851, %v859
        %v868 = vadd.f32 %v864, 1e-06
        %v869 = vadd.f32 %v865, 1e-06
        %v870 = vadd.f32 %v866, 1e-06
        %v871 = vadd.f32 %v867, 1e-06
        %v872 = vrcp.pop %v868
        %v873 = vrcp.pop %v869
        %v874 = vrcp.pop %v870
        %v875 = vrcp.pop %v871
        %v876 = vperm.slane %v848, 0
        %v877 = vperm.slane %v849, 0
        %v878 = vperm.slane %v850, 0
        %v879 = vperm.slane %v851, 0
        %v880 = vmul.f32 %v848, %v876
        %v881 = vmul.f32 %v849, %v877
        %v882 = vmul.f32 %v850, %v878
        %v883 = vmul.f32 %v851, %v879
        %v884 = vperm.slane %v848, 4
        %v885 = vperm.slane %v849, 4
        %v886 = vperm.slane %v850, 4
        %v887 = vperm.slane %v851, 4
        %v888 = vmul.f32 %v848, %v884
        %v889 = vmul.f32 %v849, %v885
        %v890 = vmul.f32 %v850, %v886
        %v891 = vmul.f32 %v851, %v887
        %v896 = vrot.slane %v888, 4
        %v897 = vrot.slane %v889, 4
        %v898 = vrot.slane %v890, 4
        %v899 = vrot.slane %v891, 4
        %v904 = vadd.f32 %v880, %v896
        %v905 = vadd.f32 %v881, %v897
        %v906 = vadd.f32 %v882, %v898
        %v907 = vadd.f32 %v883, %v899
        %v908 = vperm.slane %v872, 0
        %v909 = vperm.slane %v873, 0
        %v910 = vperm.slane %v874, 0
        %v911 = vperm.slane %v875, 0
        %v912 = vmul.f32 %v904, %v908
        %v913 = vmul.f32 %v905, %v909
        %v914 = vmul.f32 %v906, %v910
        %v915 = vmul.f32 %v907, %v911
        %v920 = vrot.slane %v912, 1
        %v921 = vrot.slane %v913, 1
        %v922 = vrot.slane %v914, 1
        %v923 = vrot.slane %v915, 1
        %v932 = vrot.slane %v864, 5
        %v933 = vrot.slane %v865, 5
        %v934 = vrot.slane %v866, 5
        %v935 = vrot.slane %v867, 5
        %v940 = vrot.slane %v848, 5
        %v941 = vrot.slane %v849, 5
        %v942 = vrot.slane %v850, 5
        %v943 = vrot.slane %v851, 5
        %v948 = vrot.slane %v848, 6
        %v949 = vrot.slane %v849, 6
        %v950 = vrot.slane %v850, 6
        %v951 = vrot.slane %v851, 6
        %v956 = vrot.slane %v848, 1
        %v957 = vrot.slane %v849, 1
        %v958 = vrot.slane %v850, 1
        %v959 = vrot.slane %v851, 1
        %vm964 = vcmask 1042432
        %v965 = vsel %vm964, %v920, %v932
        %v966 = vsel %vm964, %v921, %v933
        %v967 = vsel %vm964, %v922, %v934
        %v968 = vsel %vm964, %v923, %v935
        %v969 = vsel %vm299, %v965, %v940
        %v970 = vsel %vm299, %v966, %v941
        %v971 = vsel %vm299, %v967, %v942
        %v972 = vsel %vm299, %v968, %v943
        %vm973 = vcmask 1046528
        %v974 = vsel %vm973, %v969, %v948
        %v975 = vsel %vm973, %v970, %v949
        %v976 = vsel %vm973, %v971, %v950
        %v977 = vsel %vm973, %v972, %v951
        %vm978 = vcmask 1041408
        %v979 = vsel %vm978, %v948, %v948
        %v980 = vsel %vm978, %v949, %v949
        %v981 = vsel %vm978, %v950, %v950
        %v982 = vsel %vm978, %v951, %v951
        %v983 = vsel %vm964, %v979, %v956
        %v984 = vsel %vm964, %v980, %v957
        %v985 = vsel %vm964, %v981, %v958
        %v986 = vsel %vm964, %v982, %v959
        %987 = vst [vmem:[%s241] sm:$0xff] %v974
        %988 = vst [vmem:[%s241 + $0x8] sm:$0xff] %v975
        %989 = vst [vmem:[%s241 + $0x10] sm:$0xff] %v976
        %990 = vst [vmem:[%s241 + $0x18] sm:$0xff] %v977
        %991 = vst [vmem:[%s241 + $0x20] sm:$0xf] %v983
        %992 = vst [vmem:[%s241 + $0x28] sm:$0xf] %v984
        %993 = vst [vmem:[%s241 + $0x30] sm:$0xf] %v985
        %994 = vst [vmem:[%s241 + $0x38] sm:$0xf] %v986
        %s995 = sand.u32 %s156, 1
        %s996 = sand.u32 %s156, 1
        %s997 = smul.addr %s996, 64
        %s998 = scalar_lea.vmem [#allocation2], %s997
        // Predicated region
        $region45: #{hybrid_forward.1} parent=43 // pred_check
          %p999 = pneg %p166
        $region46: #{hybrid_forward.1} parent=43 // pred_check_branch
          %1001 = sbr.rel (%p999) target = $region48
        $region47: #{hybrid_forward.1} parent=43 // pred_region
          %s1002 = smul.u32 4, %s17
          %s1003 = smul.addr %s1002, 8
          %s1004 = scalar_lea.vmem %s6, %s1003
          // Predicated region
          $region49: #{hybrid_forward.1} parent=47 // pred_check
            _
          $region50: #{hybrid_forward.1} parent=47 // pred_check_branch
            %1006 = sbr.rel (0) target = $region52
          $region51: #{hybrid_forward.1} parent=47 // pred_region
            // Predicated region
            $region53: #{hybrid_forward.1} parent=51 // pred_check
              _
            $region54: #{hybrid_forward.1} parent=51 // pred_check_branch
              %1008 = sbr.rel (0) target = $region56
            $region55: #{hybrid_forward.1} parent=51 // pred_region
              loop: start=0, step=1, limit=1
              $region57: #{hybrid_forward.1} parent=55 // loop_pre_header
                _
              $region58: #{hybrid_forward.1} parent=55 // loop_header
                %s1010 = sphi 0, %s1014
                %p1011 = scmp.ge.s32.totalorder %s1010, 1
                %s1015 = sphi %s998, %s998
                %s1016 = sphi %s1004, %s1004
              $region59: #{hybrid_forward.1} parent=55 // loop_header_branch
                %1013 = sbr.rel (%p1011) target = $region63
              $region60: #{hybrid_forward.1} parent=55 // loop_body
                %v1017 = vld [vmem:[%s1015] sm:$0xff]
                %1018 = vst [vmem:[%s1016] sm:$0xff] %v1017
                %v1019 = vld [vmem:[%s1015 + $0x8] sm:$0xff]
                %1020 = vst [vmem:[%s1016 + $0x8] sm:$0xff] %v1019
                %v1021 = vld [vmem:[%s1015 + $0x10] sm:$0xff]
                %1022 = vst [vmem:[%s1016 + $0x10] sm:$0xff] %v1021
                %v1023 = vld [vmem:[%s1015 + $0x18] sm:$0xff]
                %1024 = vst [vmem:[%s1016 + $0x18] sm:$0xff] %v1023
                %v1025 = vld [vmem:[%s1015 + $0x20] sm:$0xff]
                %1026 = vst [vmem:[%s1016 + $0x40] sm:$0xff] %v1025
                %v1027 = vld [vmem:[%s1015 + $0x28] sm:$0xff]
                %1028 = vst [vmem:[%s1016 + $0x48] sm:$0xff] %v1027
                %v1029 = vld [vmem:[%s1015 + $0x30] sm:$0xff]
                %1030 = vst [vmem:[%s1016 + $0x50] sm:$0xff] %v1029
                %v1031 = vld [vmem:[%s1015 + $0x38] sm:$0xff]
                %1032 = vst [vmem:[%s1016 + $0x58] sm:$0xff] %v1031
              $region61: #{hybrid_forward.1} parent=55 // loop_footer
                %s1014 = sadd.s32 1, %s1010
              $region62: #{hybrid_forward.1} parent=55 // loop_footer_branch
                %1009 = sbr.rel target = $region58
              $region63: #{hybrid_forward.1} parent=55 // loop_exit
                _
            $region56: #{hybrid_forward.1} parent=51 // pred_fallthru
              _
            // Predicated region
            $region64: #{hybrid_forward.1} parent=51 // pred_check
              _
            $region65: #{hybrid_forward.1} parent=51 // pred_check_branch
              %1034 = sbr.rel target = $region67
            $region66: #{hybrid_forward.1} parent=51 // pred_region
              _
            $region67: #{hybrid_forward.1} parent=51 // pred_fallthru
              _
          $region52: #{hybrid_forward.1} parent=47 // pred_fallthru
            _
          %1035 = vnop
        $region48: #{hybrid_forward.1} parent=43 // pred_fallthru
          _
      $region44: #{hybrid_forward.1} parent=5 // pred_fallthru
        _
      %p1036 = scmp.le.s32.totalorder 2, %s12
      // Predicated region
      $region68: #{hybrid_forward.1} parent=5 // pred_check
        %p1037 = pneg %p1036
      $region69: #{hybrid_forward.1} parent=5 // pred_check_branch
        %1039 = sbr.rel (%p1037) target = $region71
      $region70: #{hybrid_forward.1} parent=5 // pred_region
        %s1040 = ssub.s32 %s12, 2
        // Predicated region
        $region72: #{hybrid_forward.1} parent=70 // pred_check
          %p1041 = pneg %p172
        $region73: #{hybrid_forward.1} parent=70 // pred_check_branch
          %1043 = sbr.rel (%p1041) target = $region75
        $region74: #{hybrid_forward.1} parent=70 // pred_region
          %s1044 = sand.u32 %s157, 1
          %s1045 = sand.u32 %s157, 1
          %s1046 = smul.addr %s1045, 64
          %s1047 = scalar_lea.vmem [#allocation2], %s1046
        $region75: #{hybrid_forward.1} parent=70 // pred_fallthru
          _
      $region71: #{hybrid_forward.1} parent=5 // pred_fallthru
        _
    $region6: #{hybrid_forward.1} parent=1 // loop_footer
      %s16 = sadd.s32 1, %s12
    $region7: #{hybrid_forward.1} parent=1 // loop_footer_branch
      %11 = sbr.rel target = $region3
    $region8: #{hybrid_forward.1} parent=1 // loop_exit
      _

</llo_original>
